<compile_context>
chip_gen: v5e
topology: v5e:2x2
jax: 0.10.0
libtpu: 0.0.40
codegen_flags: <defaults>
</compile_context>

<pallas_src>
import functools

import jax
import jax.numpy as jnp
from jax.experimental import pallas as pl
from jax.experimental.pallas import tpu as pltpu


def _round_up(x, m):
    return ((x + m - 1) // m) * m


def _vmem_capacity_bytes():
    """Physical per-core VMEM (128 MiB v5e/v6e, 64 MiB per TC on v7x); safe fallback."""
    try:
        cap = int(pltpu.get_tpu_info().vmem_capacity_bytes)
        if cap > 0:
            return cap
    except Exception:
        pass
    return 64 * 1024 * 1024


def focal_loss_kernel(logits_ref, targets_ref, alpha_ref, out_ref, *,
                      gamma, n_total, tile_n):
    i = pl.program_id(0)

    x = logits_ref[...].astype(jnp.float32)   # (TILE_N, C); bf16 stays bf16 in HBM, cast here
    t = targets_ref[...]                      # (TILE_N, 1) int32 target ids
    a_row = alpha_ref[...]                    # (1, C) f32 per-class alpha (VMEM resident)

    tn, c = x.shape

    # Target-column selector (bool compare; no f32 one-hot materialized).
    col = jax.lax.broadcasted_iota(jnp.int32, (tn, c), 1)
    is_t = col == t                                                   # (TILE_N, C) bool

    # log-softmax evaluated only at the target column (no full (N, C) divide).
    m = jnp.max(x, axis=1, keepdims=True)                             # (TILE_N, 1)
    den = jnp.sum(jnp.exp(x - m), axis=1, keepdims=True)              # (TILE_N, 1)
    x_t = jnp.sum(jnp.where(is_t, x, 0.0), axis=1, keepdims=True)     # target logit
    alpha_t = jnp.sum(jnp.where(is_t, a_row, 0.0), axis=1, keepdims=True)

    log_p = (x_t - m) - jnp.log(den)                                  # log softmax[target]
    probs = jnp.exp(log_p)                                            # softmax[target]

    # (1 - p)^gamma: multiply chain for small integer gamma (avoids exp/log lowering
    # of jnp.power and its log(0) hazard at probs == 1).
    d = 1.0 - probs
    if float(gamma) == int(gamma) and 0 <= int(gamma) <= 8:
        focal = jnp.ones_like(d)
        for _ in range(int(gamma)):
            focal = focal * d
    else:
        focal = jnp.power(d, gamma)

    batch_loss = -alpha_t * focal * log_p                             # (TILE_N, 1)

    # Mask rows past the true batch size (ragged / padded last tile). All ops above
    # are strictly per-row, so garbage rows never leak into valid rows.
    row = jax.lax.broadcasted_iota(jnp.int32, (tn, 1), 0)
    valid = (i * tile_n + row) < n_total
    partial = jnp.sum(jnp.where(valid, batch_loss, 0.0))

    # Lane-dense (8, 128) unmasked partial-sum write; wrapper reduces [:, 0, 0].
    out_ref[...] = jnp.full(out_ref.shape, partial, dtype=jnp.float32)


def focal_loss(logits, targets, alpha, gamma=2.0, size_average=True, tile_n=None):
    """Pallas-backed FocalLoss.forward.

    logits:  (N, C) float (any float dtype; cast to f32 inside the kernel)
    targets: (N,)   int
    alpha:   (C, 1) or (C,) float  (per-class scalar factor)
    tile_n:  optional override; by default sized from the VMEM budget.
    Returns a scalar float32 loss.
    """
    n, c = logits.shape
    n_pad8 = _round_up(n, 8)

    vmem_cap = _vmem_capacity_bytes()
    vmem_limit = (3 * vmem_cap) // 4          # explicit scoped-VMEM limit
    budget = vmem_limit // 2                  # target per-step working set

    itemsize = jnp.dtype(logits.dtype).itemsize
    # Per-row VMEM working set of one grid step:
    #   2 double-buffered logits blocks  : 2 * C * itemsize
    #   2 double-buffered targets blocks : 2 * 512 B  ((tile_n,1) int32 pads lanes to 128)
    #   ~4 full-tile f32 temporaries     : 4 * C * 4
    per_row_bytes = 2 * c * itemsize + 2 * 512 + 4 * c * 4

    if tile_n is None:
        tile_n = int(budget // per_row_bytes)
        tile_n = max(8, min(tile_n, 32768, n_pad8))
        tile_n = max(8, (tile_n // 8) * 8)
        # v7x megacore: ensure >= 2 blocks on the "parallel" axis so both
        # TensorCores get work (no-op on single-TC v5e/v6e).
        if -(-n // tile_n) == 1 and n_pad8 >= 16:
            tile_n = _round_up(-(-n // 2), 8)
    else:
        tile_n = max(8, min(int(tile_n), n_pad8))
        tile_n = max(8, (tile_n // 8) * 8)

    num_blocks = -(-n // tile_n)

    targets2d = targets.reshape(n, 1).astype(jnp.int32)
    alpha_row = jnp.asarray(alpha, jnp.float32).reshape(1, c)

    kernel = functools.partial(focal_loss_kernel, gamma=float(gamma),
                               n_total=n, tile_n=tile_n)

    partials = pl.pallas_call(
        kernel,
        out_shape=jax.ShapeDtypeStruct((num_blocks, 8, 128), jnp.float32),
        grid=(num_blocks,),
        in_specs=[
            pl.BlockSpec((tile_n, c), lambda i: (i, 0)),   # logits tile
            pl.BlockSpec((tile_n, 1), lambda i: (i, 0)),   # targets tile
            pl.BlockSpec((1, c), lambda i: (0, 0)),        # alpha (resident)
        ],
        out_specs=pl.BlockSpec((1, 8, 128), lambda i: (i, 0, 0)),
        compiler_params=pltpu.CompilerParams(
            # Per-block partial sums are independent -> megacore-shardable (v7x).
            dimension_semantics=("parallel",),
            vmem_limit_bytes=int(vmem_limit)),
    )(logits, targets2d, alpha_row)

    total = jnp.sum(partials[:, 0, 0])
    if size_average:
        return total / n
    return total


def focal_loss_ref(logits, targets, alpha, gamma=2.0, size_average=True):
    """Pure-JAX reference mirroring the PyTorch module."""
    n, c = logits.shape
    p = jax.nn.softmax(logits.astype(jnp.float32), axis=1)
    mask = jax.nn.one_hot(targets, c, dtype=jnp.float32)
    probs = jnp.sum(p * mask, axis=1, keepdims=True)
    a = jnp.asarray(alpha, jnp.float32).reshape(c)[targets].reshape(n, 1)
    batch_loss = -a * jnp.power(1.0 - probs, gamma) * jnp.log(probs)
    return jnp.mean(batch_loss) if size_average else jnp.sum(batch_loss)


if __name__ == "__main__":
    key = jax.random.PRNGKey(0)
    class_num = 16   # C
    batch = 8        # N
    gamma = 2.0

    k1, k2, k3, k4 = jax.random.split(key, 4)
    logits = jax.random.normal(k1, (batch, class_num), dtype=jnp.float32)
    targets = jax.random.randint(k2, (batch,), 0, class_num, dtype=jnp.int32)
    # alpha=None in __init__  ->  torch.ones(class_num, 1)
    alpha = jnp.ones((class_num, 1), dtype=jnp.float32)

    # 1) Auto-tiled, size_average=True.
    loss = focal_loss(logits, targets, alpha, gamma=gamma, size_average=True)
    loss = jax.block_until_ready(loss)
    ref = focal_loss_ref(logits, targets, alpha, gamma=gamma, size_average=True)
    assert jnp.allclose(loss, ref, rtol=1e-5, atol=1e-6), (loss, ref)

    # 2) Ragged multi-block test (N=20, explicit TILE_N=8 -> 3 blocks, last masked)
    # with non-uniform alpha and size_average=False.
    n2 = 20
    logits2 = jax.random.normal(k3, (n2, class_num), dtype=jnp.float32) * 3.0
    targets2 = jax.random.randint(k4, (n2,), 0, class_num, dtype=jnp.int32)
    alpha2 = jnp.linspace(0.25, 1.0, class_num, dtype=jnp.float32).reshape(class_num, 1)
    loss2 = focal_loss(logits2, targets2, alpha2, gamma=gamma,
                       size_average=False, tile_n=8)
    loss2 = jax.block_until_ready(loss2)
    ref2 = focal_loss_ref(logits2, targets2, alpha2, gamma=gamma, size_average=False)
    assert jnp.allclose(loss2, ref2, rtol=1e-5, atol=1e-6), (loss2, ref2)

    # 2b) Same inputs, auto tile -> exercises the 2-block megacore split + masking.
    loss2b = focal_loss(logits2, targets2, alpha2, gamma=gamma, size_average=False)
    loss2b = jax.block_until_ready(loss2b)
    assert jnp.allclose(loss2b, ref2, rtol=1e-5, atol=1e-6), (loss2b, ref2)

    # 3) bf16 logits: cast happens inside the kernel (no HBM f32 copy).
    logits_bf16 = logits.astype(jnp.bfloat16)
    loss3 = focal_loss(logits_bf16, targets, alpha, gamma=gamma, size_average=True)
    loss3 = jax.block_until_ready(loss3)
    ref3 = focal_loss_ref(logits_bf16.astype(jnp.float32), targets, alpha,
                          gamma=gamma, size_average=True)
    assert jnp.allclose(loss3, ref3, rtol=1e-5, atol=1e-6), (loss3, ref3)

    print("KERNEL_OK")
</pallas_src>

<mosaic_0001>
module attributes {stable_mosaic.version = 11 : i64} {
  func.func @focal_loss_kernel(%arg0: i32, %arg1: memref<8x16xf32, #tpu.memory_space<vmem>>, %arg2: memref<8x1xi32, #tpu.memory_space<vmem>>, %arg3: memref<1x16xf32, #tpu.memory_space<vmem>>, %arg4: memref<1x8x128xf32, #tpu.memory_space<vmem>>) attributes {dimension_semantics = [#tpu.dimension_semantics<parallel>], iteration_bounds = array<i64: 1>, scalar_prefetch = 0 : i64, scratch_operands = 0 : i64, tpu.core_type = #tpu.core_type<tc>, window_params = [{transform_indices = @transform_0, window_bounds = array<i64: 8, 16>}, {transform_indices = @transform_1, window_bounds = array<i64: 8, 1>}, {pipeline_mode = #tpu.pipeline_mode<synchronous>, transform_indices = @transform_2, window_bounds = array<i64: 1, 16>}, {transform_indices = @transform_3, window_bounds = array<i64: 1, 8, 128>}]} {
    %c0 = arith.constant 0 : index
    %c0_0 = arith.constant 0 : index
    %0 = vector.load %arg1[%c0, %c0_0] : memref<8x16xf32, #tpu.memory_space<vmem>>, vector<8x16xf32>
    %c0_1 = arith.constant 0 : index
    %c0_2 = arith.constant 0 : index
    %1 = vector.load %arg2[%c0_1, %c0_2] : memref<8x1xi32, #tpu.memory_space<vmem>>, vector<8x1xi32>
    %c0_3 = arith.constant 0 : index
    %c0_4 = arith.constant 0 : index
    %2 = vector.load %arg3[%c0_3, %c0_4] : memref<1x16xf32, #tpu.memory_space<vmem>>, vector<1x16xf32>
    %3 = tpu.iota {dimensions = array<i32: 1>} : vector<8x16xi32>
    %4 = vector.broadcast %1 : vector<8x1xi32> to vector<8x16xi32>
    %5 = arith.cmpi eq, %3, %4 : vector<8x16xi32>
    %cst = arith.constant dense<0xFF800000> : vector<8xf32>
    %6 = vector.multi_reduction <maximumf>, %0, %cst [1] : vector<8x16xf32> to vector<8xf32>
    %7 = vector.shape_cast %6 : vector<8xf32> to vector<8x1xf32>
    %8 = vector.broadcast %7 : vector<8x1xf32> to vector<8x16xf32>
    %9 = arith.subf %0, %8 : vector<8x16xf32>
    %10 = math.exp %9 : vector<8x16xf32>
    %cst_5 = arith.constant dense<0.000000e+00> : vector<8xf32>
    %11 = vector.multi_reduction <add>, %10, %cst_5 [1] : vector<8x16xf32> to vector<8xf32>
    %12 = vector.shape_cast %11 : vector<8xf32> to vector<8x1xf32>
    %cst_6 = arith.constant 0.000000e+00 : f32
    %13 = vector.broadcast %cst_6 : f32 to vector<8x16xf32>
    %14 = arith.select %5, %0, %13 : vector<8x16xi1>, vector<8x16xf32>
    %cst_7 = arith.constant dense<0.000000e+00> : vector<8xf32>
    %15 = vector.multi_reduction <add>, %14, %cst_7 [1] : vector<8x16xf32> to vector<8xf32>
    %16 = vector.shape_cast %15 : vector<8xf32> to vector<8x1xf32>
    %cst_8 = arith.constant 0.000000e+00 : f32
    %17 = vector.shape_cast %2 : vector<1x16xf32> to vector<1x16xf32>
    %18 = vector.broadcast %17 : vector<1x16xf32> to vector<8x16xf32>
    %19 = vector.broadcast %cst_8 : f32 to vector<8x16xf32>
    %20 = arith.select %5, %18, %19 : vector<8x16xi1>, vector<8x16xf32>
    %cst_9 = arith.constant dense<0.000000e+00> : vector<8xf32>
    %21 = vector.multi_reduction <add>, %20, %cst_9 [1] : vector<8x16xf32> to vector<8xf32>
    %22 = vector.shape_cast %21 : vector<8xf32> to vector<8x1xf32>
    %23 = arith.subf %16, %7 : vector<8x1xf32>
    %24 = math.log %12 : vector<8x1xf32>
    %25 = arith.subf %23, %24 : vector<8x1xf32>
    %26 = math.exp %25 : vector<8x1xf32>
    %cst_10 = arith.constant 1.000000e+00 : f32
    %27 = vector.broadcast %cst_10 : f32 to vector<8x1xf32>
    %28 = arith.subf %27, %26 : vector<8x1xf32>
    %cst_11 = arith.constant 1.000000e+00 : f32
    %29 = vector.broadcast %cst_11 : f32 to vector<8x1xf32>
    %30 = arith.mulf %29, %28 : vector<8x1xf32>
    %31 = arith.mulf %30, %28 : vector<8x1xf32>
    %cst_12 = arith.constant 0.000000e+00 : f32
    %32 = vector.broadcast %cst_12 : f32 to vector<8x1xf32>
    %33 = arith.subf %32, %22 : vector<8x1xf32>
    %34 = arith.mulf %33, %31 : vector<8x1xf32>
    %35 = arith.mulf %34, %25 : vector<8x1xf32>
    %36 = tpu.iota {dimensions = array<i32: 0>} : vector<8x1xi32>
    %c8_i32 = arith.constant 8 : i32
    %37 = arith.muli %arg0, %c8_i32 : i32
    %38 = vector.broadcast %37 : i32 to vector<8x1xi32>
    %39 = arith.addi %38, %36 : vector<8x1xi32>
    %c8_i32_13 = arith.constant 8 : i32
    %40 = vector.broadcast %c8_i32_13 : i32 to vector<8x1xi32>
    %41 = arith.cmpi slt, %39, %40 : vector<8x1xi32>
    %cst_14 = arith.constant 0.000000e+00 : f32
    %42 = vector.broadcast %cst_14 : f32 to vector<8x1xf32>
    %43 = arith.select %41, %35, %42 : vector<8x1xi1>, vector<8x1xf32>
    %44 = vector.shape_cast %43 : vector<8x1xf32> to vector<1x8x1xf32>
    %cst_15 = arith.constant dense<0.000000e+00> : vector<1xf32>
    %45 = vector.multi_reduction <add>, %44, %cst_15 [1, 2] : vector<1x8x1xf32> to vector<1xf32>
    %46 = vector.shape_cast %45 : vector<1xf32> to vector<1x1x1xf32>
    %47 = vector.extract %46[0, 0, 0] : f32 from vector<1x1x1xf32>
    %48 = vector.broadcast %47 : f32 to vector<1x8x128xf32>
    %c0_16 = arith.constant 0 : index
    %c0_17 = arith.constant 0 : index
    %c0_18 = arith.constant 0 : index
    %49 = vector.load %arg4[%c0_16, %c0_17, %c0_18] : memref<1x8x128xf32, #tpu.memory_space<vmem>>, vector<1x8x128xf32>
    tpu.vector_store %arg4[%c0_16, %c0_17, %c0_18], %48 {strides = array<i32>} : memref<1x8x128xf32, #tpu.memory_space<vmem>>, vector<1x8x128xf32>,
    return
  }
  func.func @transform_0(%arg0: i32) -> (i32, i32) {
    %c0_i32 = arith.constant 0 : i32
    %c0_i32_0 = arith.constant 0 : i32
    return %arg0, %c0_i32 : i32, i32
  }
  func.func @transform_1(%arg0: i32) -> (i32, i32) {
    %c0_i32 = arith.constant 0 : i32
    %c0_i32_0 = arith.constant 0 : i32
    return %arg0, %c0_i32 : i32, i32
  }
  func.func @transform_2(%arg0: i32) -> (i32, i32) {
    %c0_i32 = arith.constant 0 : i32
    %c0_i32_0 = arith.constant 0 : i32
    %c0_i32_1 = arith.constant 0 : i32
    return %c0_i32, %c0_i32_0 : i32, i32
  }
  func.func @transform_3(%arg0: i32) -> (i32, i32, i32) {
    %c0_i32 = arith.constant 0 : i32
    %c0_i32_0 = arith.constant 0 : i32
    %c0_i32_1 = arith.constant 0 : i32
    return %arg0, %c0_i32, %c0_i32_0 : i32, i32, i32
  }
}

</mosaic_0001>

<llo_original>
// kernel: tpu_custom_call.1
$region0: #{tpu_custom_call.1}
  #allocation0 [shape = 'u32[]', space=smem, size = 0x4, offset = 0x4, fixed_abs, tag = 'smem constant byte address 0x4 - core index']
  #allocation1 [shape = 'u32[72,128]{1,0:T(1,128)}', space=vmem, size = 0x9000, scoped, tag = 'internal scratch']
  %s0 = inlined_call_operand.vmem [shape: f32[8,16], index: 0, kind: input, shape index: {}]
  %s1 = inlined_call_operand.vmem [shape: s32[8,1], index: 1, kind: input, shape index: {}]
  %s2 = inlined_call_operand.vmem [shape: f32[1,16], index: 2, kind: input, shape index: {}]
  %s3 = inlined_call_operand.hbm [shape: f32[1,8,128], index: 3, kind: output, shape index: {}]
  %s4 = sld [smem:[#allocation0]]
  $region22: #{tpu_custom_call.1} parent=0
    _
  %s6 = ssub.s32 1, %s4
  %s7 = scalar_select 0, %s6, %s4
  $region1: #{tpu_custom_call.1} parent=0
    #allocation2 [shape = 'u8[4096]{0}', space=vmem, size = 0x1000, scoped, tag = 'output window, operand 0, single buffered']
    #allocation3 [shape = 's32[1]{0}', space=sflag, size = 0x4, scoped, tag = 'scoped memory for tpu_custom_call.1']
    %8 = vsyncpa [#allocation3], 0
    // Predicated region
    $region2: #{tpu_custom_call.1} parent=1 // pred_check
      _
    $region3: #{tpu_custom_call.1} parent=1 // pred_check_branch
      %10 = sbr.rel (0) target = $region5
    $region4: #{tpu_custom_call.1} parent=1 // pred_region
      _
    $region5: #{tpu_custom_call.1} parent=1 // pred_fallthru
      _
    // Predicated region
    $region6: #{tpu_custom_call.1} parent=1 // pred_check
      _
    $region7: #{tpu_custom_call.1} parent=1 // pred_check_branch
      %12 = sbr.rel (0) target = $region9
    $region8: #{tpu_custom_call.1} parent=1 // pred_region
      _
    $region9: #{tpu_custom_call.1} parent=1 // pred_fallthru
      _
    // Predicated region
    $region10: #{tpu_custom_call.1} parent=1 // pred_check
      _
    $region11: #{tpu_custom_call.1} parent=1 // pred_check_branch
      %14 = sbr.rel (0) target = $region13
    $region12: #{tpu_custom_call.1} parent=1 // pred_region
      _
    $region13: #{tpu_custom_call.1} parent=1 // pred_fallthru
      _
    %v15 = vld [vmem:[%s0] sm:$0xff]
    %v16 = vld [vmem:[%s1] sm:$0xff]
    %v17 = vld [vmem:[%s2] sm:$0x1]
    %v18 = vlaneseq
    %v19 = vand.u32 %v18, 127
    %20 = vset.pattern.permute.xlu0 0
    %21 = vperm.xlu0 %20, %v16
    %v22 = vpop.permute.xlu0 %21
    %vm23 = vcmp.eq.s32.totalorder %v19, %v22
    %vm24 = vcmask 130048
    %v25 = vsel %vm24, %v15, -inf
    %26 = vmax.xlane.f32.xlu0 %v25
    %v27 = vpop.xlane.xlu0 %26
    %v28 = vsub.f32 %v15, %v27
    %v29 = vmul.f32 %v28, 1.442695
    %v30 = vpow.pop %v29
    %v31 = vsel %vm24, %v30, 0.0
    %32 = vadd.xlane.f32.xlu0 %v31
    %v33 = vpop.xlane.xlu0 %32
    %v34 = vsel %vm23, %v15, 0.0
    %v35 = vsel %vm24, %v34, 0.0
    %36 = vadd.xlane.f32.xlu0 %v35
    %v37 = vpop.xlane.xlu0 %36
    %v39 = vperm.slane %v17, 0
    %v41 = vsel %vm23, %v39, 0.0
    %v42 = vsel %vm24, %v41, 0.0
    %43 = vadd.xlane.f32.xlu0 %v42
    %v44 = vpop.xlane.xlu0 %43
    %v45 = vsub.f32 %v37, %v27
    %v46 = vlog2.pop %v33
    %v47 = vmul.f32 %v46, 0.6931472
    %v48 = vsub.f32 %v45, %v47
    %v49 = vmul.f32 %v48, 1.442695
    %v50 = vpow.pop %v49
    %v51 = vsub.f32 1.0, %v50
    %v52 = vmul.f32 %v51, %v51
    %v53 = vsub.f32 0.0, %v44
    %v54 = vmul.f32 %v53, %v52
    %v55 = vmul.f32 %v54, %v48
    %v56 = vlaneseq
    %v57 = vshrl.u32 %v56, 7
    %s58 = smul.u32 0, 8
    %v59 = vstv %s58
    %v60 = vadd.s32 %v59, %v57
    %vm61 = vcmp.lt.s32.totalorder %v60, 8
    %v62 = vsel %vm61, %v55, 0.0
    %vm63 = vcmask 7168
    %v64 = vsel %vm63, %v62, 0.0
    %65 = vadd.xlane.f32.xlu0 %v64
    %v66 = vpop.xlane.xlu0 %65
    %v67 = vrot.slane %v66, 4
    %v68 = vadd.f32 %v66, %v67
    %v69 = vrot.slane %v68, 2
    %v70 = vadd.f32 %v68, %v69
    %v71 = vrot.slane %v70, 1
    %v72 = vadd.f32 %v70, %v71
    %s73 = vtos %v72
    %v74 = vstv %s73
    %75 = vst [vmem:[#allocation2] sm:$0xff] %v74
    // Predicated region
    $region14: #{tpu_custom_call.1} parent=1 // pred_check
      _
    $region15: #{tpu_custom_call.1} parent=1 // pred_check_branch
      %77 = sbr.rel (0) target = $region17
    $region16: #{tpu_custom_call.1} parent=1 // pred_region
      %79 = vsyncadd [#allocation3], 0
      %s81 = sshll.u32 [#allocation2], 4
      %s82 = int_to_ptr.vmem [resolvable:$true] %s81
      %s83 = sshll.u32 %s3, 4
      %s84 = int_to_ptr.hbm [resolvable:$true] %s83
      %86 = dma.vmem_to_hbm [thread:$0]  %s82, 128, %s84, [#allocation3]
    $region17: #{tpu_custom_call.1} parent=1 // pred_fallthru
      _
    // Predicated region
    $region18: #{tpu_custom_call.1} parent=1 // pred_check
      _
    $region19: #{tpu_custom_call.1} parent=1 // pred_check_branch
      %88 = sbr.rel (0) target = $region21
    $region20: #{tpu_custom_call.1} parent=1 // pred_region
      %90 = dma.done [#allocation3], 128
    $region21: #{tpu_custom_call.1} parent=1 // pred_fallthru
      _
    %91 = vsyncpa [#allocation3], 1

</llo_original>
